<compile_context>
chip_gen: v5e
topology: v5e:2x2
jax: 0.10.0
libtpu: 0.0.40
codegen_flags: <defaults>
</compile_context>

<pallas_src>
import jax
import jax.numpy as jnp
from jax.experimental import pallas as pl
from jax.experimental.pallas import tpu as pltpu


def _round_up(x: int, m: int) -> int:
    return ((x + m - 1) // m) * m


def _make_diffusion_kernel(num_supports: int, max_diffusion_step: int, matmul_dtype):
    S, K, mdt = num_supports, max_diffusion_step, matmul_dtype

    def kernel(supports_ref, x_ref, w_ref, b_ref, out_ref):
        # x_ref: (N, BtFp) for the current batch tile (tile dim squeezed).
        # The Chebyshev-style recurrence is kept in f32; operands are cast to
        # `mdt` only when fed to the MXU.
        x0 = x_ref[...].astype(jnp.float32)
        states = [x0]
        if K > 0:
            # Faithful replication of the PyTorch loop: x0/x1 carry over between
            # supports exactly as in the reference code.
            for s in range(S):
                sup = supports_ref[s]                              # (N, N), mdt
                x1 = jnp.dot(sup, x0.astype(mdt),
                             preferred_element_type=jnp.float32)
                states.append(x1)
                for _ in range(2, K + 1):
                    x2 = 2.0 * jnp.dot(sup, x1.astype(mdt),
                                       preferred_element_type=jnp.float32) - x0
                    states.append(x2)
                    x1, x0 = x2, x1
        # Fused projection: one (N, M*BtFp) @ (M*BtFp, OC) matmul instead of M
        # small (N, F) @ (F, O) matmuls. Each slab is a multiple of 128 lanes, so
        # the concat is tile-aligned.
        slab = jnp.concatenate(states, axis=1).astype(mdt)
        acc = jnp.dot(slab, w_ref[...], preferred_element_type=jnp.float32)
        out_ref[...] = (acc + b_ref[...]).astype(out_ref.dtype)   # lane-dense store

    return kernel


def diffusion_graph_conv(supports, inputs, state, weight, biases,
                         num_nodes, max_diffusion_step, output_dim,
                         *, batch_tile=None, compute_dtype=jnp.bfloat16):
    """Pallas implementation of DiffusionGraphConv.forward."""
    B = inputs.shape[0]
    N = num_nodes
    S = supports.shape[0]
    K = max_diffusion_step
    M = S * K + 1
    O = output_dim

    inputs = inputs.reshape(B, N, -1)
    state = state.reshape(B, N, -1)
    x0 = jnp.concatenate([inputs, state], axis=2).astype(jnp.float32)   # (B, N, F)
    F_in = x0.shape[-1]
    assert weight.shape == (F_in * M, O)

    # ---- batch tiling -------------------------------------------------------
    if batch_tile is None:
        # Keep Bt*F near one lane tile so the block-diagonal projection weight
        # stays small; bump Bt for larger graphs as VMEM allows.
        batch_tile = max(1, min(B, 128 // max(1, F_in)))
    Bt = max(1, min(int(batch_tile), B))
    G = (B + Bt - 1) // Bt
    B_pad = G * Bt
    BtF = Bt * F_in
    BtFp = _round_up(BtF, 128)           # lane-aligned per-state slab width
    OC = _round_up(Bt * O, 128)          # lane-dense output slab width

    if B_pad != B:
        x0 = jnp.pad(x0, ((0, B_pad - B), (0, 0), (0, 0)))

    # X tiles: (G, N, BtFp) with column index b*F + f (b = batch-within-tile),
    # zero-padded up to BtFp (padded columns stay zero through the recurrence
    # and hit zero rows of the fused weight, so they contribute nothing).
    x_tiles = (x0.reshape(G, Bt, N, F_in)
                 .transpose(0, 2, 1, 3)
                 .reshape(G, N, BtF))
    x_tiles = jnp.pad(x_tiles, ((0, 0), (0, 0), (0, BtFp - BtF)))
    x_tiles = x_tiles.astype(compute_dtype)

    sup_c = supports.astype(compute_dtype)

    # ---- fused projection weight -------------------------------------------
    # PyTorch flattening puts the diffusion-matrix index innermost: row = f*M + m.
    w3 = weight.reshape(F_in, M, O).transpose(1, 0, 2)          # (M, F, O)
    eye = jnp.eye(Bt, dtype=weight.dtype)
    # W_fused[m*BtFp + b*F + f, b*O + o] = W[f*M + m, o]; block-diagonal over b,
    # zero rows for the lane padding, zero-padded columns up to OC (extra output
    # lanes are sliced off below).
    w_fused = jnp.einsum('mfo,bc->mbfco', w3, eye).reshape(M, BtF, Bt * O)
    w_fused = jnp.pad(w_fused, ((0, 0), (0, BtFp - BtF), (0, OC - Bt * O)))
    w_fused = w_fused.reshape(M * BtFp, OC).astype(compute_dtype)

    b_fused = jnp.pad(jnp.tile(biases.astype(jnp.float32), Bt),
                      (0, OC - Bt * O)).reshape(1, OC)

    # ---- cost estimate & VMEM budget ----------------------------------------
    prop_flops = 2 * S * K * N * N * BtFp
    proj_flops = 2 * N * (M * BtFp) * OC
    flops = int(G * (prop_flops + proj_flops))
    sup_bytes = sup_c.size * sup_c.dtype.itemsize
    xt_bytes = N * BtFp * x_tiles.dtype.itemsize
    w_bytes = w_fused.size * w_fused.dtype.itemsize
    out_bytes = N * OC * 4
    bytes_accessed = int(sup_bytes + G * xt_bytes + w_bytes + b_fused.size * 4
                         + G * out_bytes)
    working_set = 2 * (sup_bytes + xt_bytes + w_bytes + b_fused.size * 4 + out_bytes)
    vmem_limit = int(min(96 * 1024 * 1024, max(32 * 1024 * 1024, 2 * working_set)))

    kernel = _make_diffusion_kernel(S, K, compute_dtype)
    out = pl.pallas_call(
        kernel,
        out_shape=jax.ShapeDtypeStruct((G, N, OC), jnp.float32),
        grid=(G,),
        in_specs=[
            pl.BlockSpec((S, N, N), lambda g: (0, 0, 0)),         # supports (resident)
            pl.BlockSpec((None, N, BtFp), lambda g: (g, 0, 0)),   # x batch tile
            pl.BlockSpec((M * BtFp, OC), lambda g: (0, 0)),       # fused weight (resident)
            pl.BlockSpec((1, OC), lambda g: (0, 0)),              # fused bias
        ],
        out_specs=pl.BlockSpec((None, N, OC), lambda g: (g, 0, 0)),
        compiler_params=pltpu.CompilerParams(
            dimension_semantics=("parallel",),
            vmem_limit_bytes=vmem_limit),
        cost_estimate=pl.CostEstimate(flops=flops, transcendentals=0,
                                      bytes_accessed=bytes_accessed),
    )(sup_c, x_tiles, w_fused, b_fused)

    # Strip the lane padding and undo the (tile, batch-within-tile) layout.
    out = out[:, :, :Bt * O].reshape(G, N, Bt, O)
    out = out.transpose(0, 2, 1, 3).reshape(B_pad, N, O)[:B]
    return out.reshape(B, N * O)


def reference_jax(supports, inputs, state, weight, biases,
                  num_nodes, max_diffusion_step, output_dim):
    """Pure-JAX transcription of the PyTorch forward, for verification."""
    B = inputs.shape[0]
    N = num_nodes
    K = max_diffusion_step
    O = output_dim
    inputs = inputs.reshape(B, N, -1)
    state = state.reshape(B, N, -1)
    x0 = jnp.concatenate([inputs, state], axis=2)
    mats = [x0]
    if K > 0:
        for s in range(supports.shape[0]):
            sup = supports[s]
            x1 = jnp.einsum('nm,bmf->bnf', sup, x0)
            mats.append(x1)
            for _ in range(2, K + 1):
                x2 = 2.0 * jnp.einsum('nm,bmf->bnf', sup, x1) - x0
                mats.append(x2)
                x1, x0 = x2, x1
    x = jnp.stack(mats, axis=1)            # (B, M, N, F)
    x = jnp.transpose(x, (0, 2, 3, 1))     # (B, N, F, M)
    x = x.reshape(B * N, -1)
    x = x @ weight + biases
    return x.reshape(B, N * O)


if __name__ == "__main__":
    # Small deterministic configuration ('dual_random_walk' -> 2 supports).
    num_supports = 2
    input_dim = 4
    hid_dim = 12
    num_nodes = 16
    max_diffusion_step = 2
    output_dim = 8
    batch = 16
    batch_tile = 8          # -> grid of 2 parallel batch-tile steps, Bt*F = 128

    F_in = input_dim + hid_dim
    M = num_supports * max_diffusion_step + 1

    key = jax.random.PRNGKey(0)
    k_in, k_st, k_sup, k_w = jax.random.split(key, 4)

    inputs = jax.random.normal(k_in, (batch, num_nodes * input_dim), jnp.float32)
    state = jax.random.normal(k_st, (batch, num_nodes * hid_dim), jnp.float32)

    # Deterministic synthetic random-walk supports (forward / backward transition).
    a = jax.random.uniform(k_sup, (num_nodes, num_nodes), jnp.float32) + 0.1
    p_fwd = a / jnp.sum(a, axis=1, keepdims=True)
    p_bwd = a.T / jnp.sum(a.T, axis=1, keepdims=True)
    supports = jnp.stack([p_fwd, p_bwd], axis=0)           # (S, N, N)

    # Parameters: xavier_normal_(gain=1.414) equivalent, small constant bias.
    fan_in, fan_out = F_in * M, output_dim
    std = 1.414 * (2.0 / (fan_in + fan_out)) ** 0.5
    weight = std * jax.random.normal(k_w, (fan_in, fan_out), jnp.float32)
    biases = jnp.full((output_dim,), 0.1, jnp.float32)

    ref = reference_jax(supports, inputs, state, weight, biases,
                        num_nodes, max_diffusion_step, output_dim)

    # Single kernel run, full-f32 MXU path for a tight correctness check against
    # the pure-JAX reference. (compute_dtype=jnp.bfloat16 is the production
    # default for MXU throughput; it only changes operand casts.)
    out = diffusion_graph_conv(supports, inputs, state, weight, biases,
                               num_nodes, max_diffusion_step, output_dim,
                               batch_tile=batch_tile,
                               compute_dtype=jnp.float32)
    out = jax.block_until_ready(out)
    assert out.shape == (batch, num_nodes * output_dim)
    assert jnp.allclose(out, ref, rtol=2e-3, atol=2e-3), "mismatch vs reference"

    print("KERNEL_OK")
</pallas_src>

<mosaic_0001>
module attributes {stable_mosaic.version = 11 : i64} {
  func.func @kernel(%arg0: i32, %arg1: memref<2x16x16xf32, #tpu.memory_space<vmem>>, %arg2: memref<1x16x128xf32, #tpu.memory_space<vmem>>, %arg3: memref<640x128xf32, #tpu.memory_space<vmem>>, %arg4: memref<1x128xf32, #tpu.memory_space<vmem>>, %arg5: memref<1x16x128xf32, #tpu.memory_space<vmem>>) attributes {dimension_semantics = [#tpu.dimension_semantics<parallel>], iteration_bounds = array<i64: 2>, scalar_prefetch = 0 : i64, scratch_operands = 0 : i64, tpu.core_type = #tpu.core_type<tc>, window_params = [{pipeline_mode = #tpu.pipeline_mode<synchronous>, transform_indices = @transform_0, window_bounds = array<i64: 2, 16, 16>}, {transform_indices = @transform_1, window_bounds = array<i64: 1, 16, 128>}, {pipeline_mode = #tpu.pipeline_mode<synchronous>, transform_indices = @transform_2, window_bounds = array<i64: 640, 128>}, {pipeline_mode = #tpu.pipeline_mode<synchronous>, transform_indices = @transform_3, window_bounds = array<i64: 1, 128>}, {transform_indices = @transform_4, window_bounds = array<i64: 1, 16, 128>}]} {
    %c0 = arith.constant 0 : index
    %c0_0 = arith.constant 0 : index
    %c0_1 = arith.constant 0 : index
    %0 = vector.load %arg2[%c0, %c0_0, %c0_1] : memref<1x16x128xf32, #tpu.memory_space<vmem>>, vector<1x16x128xf32>
    %1 = vector.shape_cast %0 : vector<1x16x128xf32> to vector<16x128xf32>
    %c0_2 = arith.constant 0 : index
    %c0_3 = arith.constant 0 : index
    %c0_4 = arith.constant 0 : index
    %2 = vector.load %arg1[%c0_2, %c0_3, %c0_4] : memref<2x16x16xf32, #tpu.memory_space<vmem>>, vector<1x16x16xf32>
    %3 = vector.shape_cast %2 : vector<1x16x16xf32> to vector<16x16xf32>
    %cst = arith.constant dense<0.000000e+00> : vector<16x128xf32>
    %4 = tpu.matmul %3, %1, %cst {dimension_numbers = #tpu.dot_dimension_numbers<[1], [0], [0], [1], [0, 0, 1, 1], [], []>} : vector<16x16xf32>, vector<16x128xf32>, vector<16x128xf32> -> vector<16x128xf32>
    %cst_5 = arith.constant dense<0.000000e+00> : vector<16x128xf32>
    %5 = tpu.matmul %3, %4, %cst_5 {dimension_numbers = #tpu.dot_dimension_numbers<[1], [0], [0], [1], [0, 0, 1, 1], [], []>} : vector<16x16xf32>, vector<16x128xf32>, vector<16x128xf32> -> vector<16x128xf32>
    %cst_6 = arith.constant 2.000000e+00 : f32
    %6 = vector.broadcast %cst_6 : f32 to vector<16x128xf32>
    %7 = arith.mulf %6, %5 : vector<16x128xf32>
    %8 = arith.subf %7, %1 : vector<16x128xf32>
    %c1 = arith.constant 1 : index
    %c0_7 = arith.constant 0 : index
    %c0_8 = arith.constant 0 : index
    %9 = vector.load %arg1[%c1, %c0_7, %c0_8] : memref<2x16x16xf32, #tpu.memory_space<vmem>>, vector<1x16x16xf32>
    %10 = vector.shape_cast %9 : vector<1x16x16xf32> to vector<16x16xf32>
    %cst_9 = arith.constant dense<0.000000e+00> : vector<16x128xf32>
    %11 = tpu.matmul %10, %4, %cst_9 {dimension_numbers = #tpu.dot_dimension_numbers<[1], [0], [0], [1], [0, 0, 1, 1], [], []>} : vector<16x16xf32>, vector<16x128xf32>, vector<16x128xf32> -> vector<16x128xf32>
    %cst_10 = arith.constant dense<0.000000e+00> : vector<16x128xf32>
    %12 = tpu.matmul %10, %11, %cst_10 {dimension_numbers = #tpu.dot_dimension_numbers<[1], [0], [0], [1], [0, 0, 1, 1], [], []>} : vector<16x16xf32>, vector<16x128xf32>, vector<16x128xf32> -> vector<16x128xf32>
    %cst_11 = arith.constant 2.000000e+00 : f32
    %13 = vector.broadcast %cst_11 : f32 to vector<16x128xf32>
    %14 = arith.mulf %13, %12 : vector<16x128xf32>
    %15 = arith.subf %14, %4 : vector<16x128xf32>
    %16 = tpu.concatenate %1, %4, %8, %11, %15 in 1 : vector<16x128xf32>, vector<16x128xf32>, vector<16x128xf32>, vector<16x128xf32>, vector<16x128xf32> -> vector<16x640xf32>
    %c0_12 = arith.constant 0 : index
    %c0_13 = arith.constant 0 : index
    %17 = vector.load %arg3[%c0_12, %c0_13] : memref<640x128xf32, #tpu.memory_space<vmem>>, vector<640x128xf32>
    %cst_14 = arith.constant dense<0.000000e+00> : vector<16x128xf32>
    %18 = tpu.matmul %16, %17, %cst_14 {dimension_numbers = #tpu.dot_dimension_numbers<[1], [0], [0], [1], [0, 0, 1, 1], [], []>} : vector<16x640xf32>, vector<640x128xf32>, vector<16x128xf32> -> vector<16x128xf32>
    %c0_15 = arith.constant 0 : index
    %c0_16 = arith.constant 0 : index
    %19 = vector.load %arg4[%c0_15, %c0_16] : memref<1x128xf32, #tpu.memory_space<vmem>>, vector<1x128xf32>
    %20 = vector.broadcast %19 : vector<1x128xf32> to vector<16x128xf32>
    %21 = arith.addf %18, %20 : vector<16x128xf32>
    %c0_17 = arith.constant 0 : index
    %c0_18 = arith.constant 0 : index
    %c0_19 = arith.constant 0 : index
    %22 = vector.load %arg5[%c0_17, %c0_18, %c0_19] : memref<1x16x128xf32, #tpu.memory_space<vmem>>, vector<1x16x128xf32>
    %23 = vector.shape_cast %22 : vector<1x16x128xf32> to vector<16x128xf32>
    %24 = vector.shape_cast %21 : vector<16x128xf32> to vector<1x16x128xf32>
    tpu.vector_store %arg5[%c0_17, %c0_18, %c0_19], %24 {strides = array<i32>} : memref<1x16x128xf32, #tpu.memory_space<vmem>>, vector<1x16x128xf32>,
    return
  }
  func.func @transform_0(%arg0: i32) -> (i32, i32, i32) {
    %c0_i32 = arith.constant 0 : i32
    %c0_i32_0 = arith.constant 0 : i32
    %c0_i32_1 = arith.constant 0 : i32
    %c0_i32_2 = arith.constant 0 : i32
    return %c0_i32, %c0_i32_0, %c0_i32_1 : i32, i32, i32
  }
  func.func @transform_1(%arg0: i32) -> (i32, i32, i32) {
    %c0_i32 = arith.constant 0 : i32
    %c0_i32_0 = arith.constant 0 : i32
    %c0_i32_1 = arith.constant 0 : i32
    return %arg0, %c0_i32, %c0_i32_0 : i32, i32, i32
  }
  func.func @transform_2(%arg0: i32) -> (i32, i32) {
    %c0_i32 = arith.constant 0 : i32
    %c0_i32_0 = arith.constant 0 : i32
    %c0_i32_1 = arith.constant 0 : i32
    return %c0_i32, %c0_i32_0 : i32, i32
  }
  func.func @transform_3(%arg0: i32) -> (i32, i32) {
    %c0_i32 = arith.constant 0 : i32
    %c0_i32_0 = arith.constant 0 : i32
    %c0_i32_1 = arith.constant 0 : i32
    return %c0_i32, %c0_i32_0 : i32, i32
  }
  func.func @transform_4(%arg0: i32) -> (i32, i32, i32) {
    %c0_i32 = arith.constant 0 : i32
    %c0_i32_0 = arith.constant 0 : i32
    %c0_i32_1 = arith.constant 0 : i32
    return %arg0, %c0_i32, %c0_i32_0 : i32, i32, i32
  }
}

</mosaic_0001>

<llo_original>
// kernel: tpu_custom_call.1
$region0: #{tpu_custom_call.1}
  #allocation0 [shape = 'u32[]', space=smem, size = 0x4, offset = 0x4, fixed_abs, tag = 'smem constant byte address 0x4 - core index']
  #allocation1 [shape = 'u32[72,128]{1,0:T(1,128)}', space=vmem, size = 0x9000, scoped, tag = 'internal scratch']
  %s0 = inlined_call_operand.hbm [shape: f32[2,16,16], index: 0, kind: input, shape index: {}]
  %s1 = inlined_call_operand.hbm [shape: f32[2,16,128], index: 1, kind: input, shape index: {}]
  %s2 = inlined_call_operand.hbm [shape: f32[640,128], index: 2, kind: input, shape index: {}]
  %s3 = inlined_call_operand.vmem [shape: f32[1,128], index: 3, kind: input, shape index: {}]
  %s4 = inlined_call_operand.hbm [shape: f32[2,16,128], index: 4, kind: output, shape index: {}]
  %s5 = sld [smem:[#allocation0]]
  $region61: #{tpu_custom_call.1} parent=0
    _
  %s7 = ssub.s32 1, %s5
  %s8 = scalar_select 0, %s7, %s5
  $region1: #{tpu_custom_call.1} parent=0
    #allocation2 [shape = 'u8[16384]{0}', space=vmem, size = 0x4000, scoped, tag = 'input window, operand 0, single buffered']
    #allocation3 [shape = 's32[2]{0}', space=sflag, size = 0x8, scoped, tag = 'scoped memory for tpu_custom_call.1']
    #allocation4 [shape = 's32[2]{0}', space=sflag, size = 0x8, scoped, tag = 'scoped memory for tpu_custom_call.1']
    #allocation5 [shape = 'u8[16384]{0}', space=vmem, size = 0x4000, scoped, tag = 'input window, operand 1']
    #allocation6 [shape = 's32[2]{0}', space=sflag, size = 0x8, scoped, tag = 'scoped memory for tpu_custom_call.1']
    #allocation7 [shape = 'u8[327680]{0}', space=vmem, size = 0x50000, scoped, tag = 'input window, operand 2, single buffered']
    #allocation8 [shape = 'u8[16384]{0}', space=vmem, size = 0x4000, scoped, tag = 'output window, operand 0']
    %9 = vsyncpa [#allocation3], 0
    %10 = vsyncpa [#allocation6], 0
    %s11 = scalar_lea.sflag [#allocation6], 1
    %12 = vsyncpa %s11, 0
    %13 = vsyncpa [#allocation4], 0
    %s14 = scalar_lea.sflag [#allocation4], 1
    %15 = vsyncpa %s14, 0
    loop: start=0, step=1, limit=4
    $region2: #{tpu_custom_call.1} parent=1 // loop_pre_header
      _
    $region3: #{tpu_custom_call.1} parent=1 // loop_header
      %s17 = sphi 0, %s21
      %p18 = scmp.ge.s32.totalorder %s17, 4
      %s25 = sphi 0, %s25
      %s27 = sphi 0, %s25
      %s28 = sphi 0, %s27
      %s42 = sphi 0, %s28
      %s48 = sphi 0, %s50
      %s51 = sphi 0, %s48
      %s52 = sphi 0, %s51
      %s68 = sphi 0, %s52
      %s72 = sphi 0, %s72
      %s74 = sphi 0, %s72
      %s75 = sphi 0, %s74
      %s89 = sphi 0, %s75
      %s93 = sphi 0, %s93
      %s95 = sphi 0, %s93
      %s96 = sphi 0, %s95
      %s110 = sphi 0, %s96
      %s116 = sphi 0, %s118
      %s119 = sphi 0, %s116
      %s120 = sphi 0, %s119
      %s136 = sphi 0, %s120
    $region4: #{tpu_custom_call.1} parent=1 // loop_header_branch
      %20 = sbr.rel (%p18) target = $region8
    $region5: #{tpu_custom_call.1} parent=1 // loop_body
      %s22 = ssub.s32 %s17, 1
      %s23 = ssub.s32 %s17, 2
      %s24 = sadd.s32 %s17, 1
      %s26 = sadd.s32 %s25, 1
      %p29 = scmp.eq.s32.totalorder %s17, 1
      %p30 = scmp.ne.s32.totalorder %s25, %s27
      %p31 = scmp.eq.s32.totalorder %s17, 0
      %p32 = por %p30, %p31
      %p33 = scmp.ne.s32.totalorder %s25, %s27
      %p34 = scmp.eq.s32.totalorder %s22, 1
      %p35 = por %p33, %p34
      %p36 = scmp.ne.s32.totalorder %s27, %s28
      %p37 = scmp.eq.s32.totalorder %s22, 0
      %p38 = por %p36, %p37
      %p39 = scmp.ne.s32.totalorder %s27, %s28
      %p40 = scmp.eq.s32.totalorder %s23, 1
      %p41 = por %p39, %p40
      %p43 = scmp.ne.s32.totalorder %s28, %s42
      %p44 = scmp.eq.s32.totalorder %s23, 0
      %p45 = por %p43, %p44
      %s46 = ssub.s32 %s17, %s24
      %p47 = scmp.eq.s32.totalorder %s46, 0
      %s49 = sadd.s32 %s48, 1
      %s50 = scalar_select %p47, %s48, %s49
      %p53 = pneg %p47
      %p54 = scmp.eq.s32.totalorder %s17, 1
      %p55 = por %p53, %p54
      %p56 = scmp.ne.s32.totalorder %s48, %s51
      %p57 = scmp.eq.s32.totalorder %s17, 0
      %p58 = por %p56, %p57
      %p59 = scmp.ne.s32.totalorder %s48, %s51
      %p60 = scmp.eq.s32.totalorder %s22, 1
      %p61 = por %p59, %p60
      %p62 = scmp.ne.s32.totalorder %s51, %s52
      %p63 = scmp.eq.s32.totalorder %s22, 0
      %p64 = por %p62, %p63
      %p65 = scmp.ne.s32.totalorder %s51, %s52
      %p66 = scmp.eq.s32.totalorder %s23, 1
      %p67 = por %p65, %p66
      %p69 = scmp.ne.s32.totalorder %s52, %s68
      %p70 = scmp.eq.s32.totalorder %s23, 0
      %p71 = por %p69, %p70
      %s73 = sadd.s32 %s72, 1
      %p76 = scmp.eq.s32.totalorder %s17, 1
      %p77 = scmp.ne.s32.totalorder %s72, %s74
      %p78 = scmp.eq.s32.totalorder %s17, 0
      %p79 = por %p77, %p78
      %p80 = scmp.ne.s32.totalorder %s72, %s74
      %p81 = scmp.eq.s32.totalorder %s22, 1
      %p82 = por %p80, %p81
      %p83 = scmp.ne.s32.totalorder %s74, %s75
      %p84 = scmp.eq.s32.totalorder %s22, 0
      %p85 = por %p83, %p84
      %p86 = scmp.ne.s32.totalorder %s74, %s75
      %p87 = scmp.eq.s32.totalorder %s23, 1
      %p88 = por %p86, %p87
      %p90 = scmp.ne.s32.totalorder %s75, %s89
      %p91 = scmp.eq.s32.totalorder %s23, 0
      %p92 = por %p90, %p91
      %s94 = sadd.s32 %s93, 1
      %p97 = scmp.eq.s32.totalorder %s17, 1
      %p98 = scmp.ne.s32.totalorder %s93, %s95
      %p99 = scmp.eq.s32.totalorder %s17, 0
      %p100 = por %p98, %p99
      %p101 = scmp.ne.s32.totalorder %s93, %s95
      %p102 = scmp.eq.s32.totalorder %s22, 1
      %p103 = por %p101, %p102
      %p104 = scmp.ne.s32.totalorder %s95, %s96
      %p105 = scmp.eq.s32.totalorder %s22, 0
      %p106 = por %p104, %p105
      %p107 = scmp.ne.s32.totalorder %s95, %s96
      %p108 = scmp.eq.s32.totalorder %s23, 1
      %p109 = por %p107, %p108
      %p111 = scmp.ne.s32.totalorder %s96, %s110
      %p112 = scmp.eq.s32.totalorder %s23, 0
      %p113 = por %p111, %p112
      %s114 = ssub.s32 %s17, %s24
      %p115 = scmp.eq.s32.totalorder %s114, 0
      %s117 = sadd.s32 %s116, 1
      %s118 = scalar_select %p115, %s116, %s117
      %p121 = pneg %p115
      %p122 = scmp.eq.s32.totalorder %s17, 1
      %p123 = por %p121, %p122
      %p124 = scmp.ne.s32.totalorder %s116, %s119
      %p125 = scmp.eq.s32.totalorder %s17, 0
      %p126 = por %p124, %p125
      %p127 = scmp.ne.s32.totalorder %s116, %s119
      %p128 = scmp.eq.s32.totalorder %s22, 1
      %p129 = por %p127, %p128
      %p130 = scmp.ne.s32.totalorder %s119, %s120
      %p131 = scmp.eq.s32.totalorder %s22, 0
      %p132 = por %p130, %p131
      %p133 = scmp.ne.s32.totalorder %s119, %s120
      %p134 = scmp.eq.s32.totalorder %s23, 1
      %p135 = por %p133, %p134
      %p137 = scmp.ne.s32.totalorder %s120, %s136
      %p138 = scmp.eq.s32.totalorder %s23, 0
      %p139 = por %p137, %p138
      %p140 = scmp.le.s32.totalorder 1, %s17
      %p141 = scmp.lt.s32.totalorder %s17, 3
      %p142 = pnand %p140, %p141
      %p143 = pneg %p142
      // Predicated region
      $region9: #{tpu_custom_call.1} parent=5 // pred_check
        _
      $region10: #{tpu_custom_call.1} parent=5 // pred_check_branch
        %145 = sbr.rel (%p142) target = $region12
      $region11: #{tpu_custom_call.1} parent=5 // pred_region
        %s146 = ssub.s32 %s17, 1
        // Predicated region
        $region13: #{tpu_custom_call.1} parent=11 // pred_check
          %p147 = pneg %p38
        $region14: #{tpu_custom_call.1} parent=11 // pred_check_branch
          %149 = sbr.rel (%p147) target = $region16
        $region15: #{tpu_custom_call.1} parent=11 // pred_region
          %151 = vsyncadd [#allocation3], 0
          %s152 = sshll.u32 %s0, 4
          %s153 = int_to_ptr.hbm [resolvable:$true] %s152
          %s154 = sshll.u32 [#allocation2], 4
          %s155 = int_to_ptr.vmem [resolvable:$true] %s154
          %160 = dma.hbm_to_vmem [thread:$0]  %s153, 512, %s155, [#allocation3], 128, 128, 8
        $region16: #{tpu_custom_call.1} parent=11 // pred_fallthru
          _
        // Predicated region
        $region17: #{tpu_custom_call.1} parent=11 // pred_check
          %p161 = pneg %p85
        $region18: #{tpu_custom_call.1} parent=11 // pred_check_branch
          %163 = sbr.rel (%p161) target = $region20
        $region19: #{tpu_custom_call.1} parent=11 // pred_region
          %165 = vsyncadd [#allocation6], 0
          %s166 = sshll.u32 %s2, 4
          %s167 = int_to_ptr.hbm [resolvable:$true] %s166
          %s168 = sshll.u32 [#allocation7], 4
          %s169 = int_to_ptr.vmem [resolvable:$true] %s168
          %174 = dma.hbm_to_vmem [thread:$0]  %s167, 10240, %s169, [#allocation6], 128, 128, 8
        $region20: #{tpu_custom_call.1} parent=11 // pred_fallthru
          _
        // Predicated region
        $region21: #{tpu_custom_call.1} parent=11 // pred_check
          %p175 = pneg %p106
        $region22: #{tpu_custom_call.1} parent=11 // pred_check_branch
          %177 = sbr.rel (%p175) target = $region24
        $region23: #{tpu_custom_call.1} parent=11 // pred_region
          _
        $region24: #{tpu_custom_call.1} parent=11 // pred_fallthru
          _
      $region12: #{tpu_custom_call.1} parent=5 // pred_fallthru
        _
      %p178 = scmp.lt.s32.totalorder %s17, 2
      // Predicated region
      $region25: #{tpu_custom_call.1} parent=5 // pred_check
        %p179 = pneg %p178
      $region26: #{tpu_custom_call.1} parent=5 // pred_check_branch
        %181 = sbr.rel (%p179) target = $region28
      $region27: #{tpu_custom_call.1} parent=5 // pred_region
        // Predicated region
        $region29: #{tpu_custom_call.1} parent=27 // pred_check
          %p182 = pneg %p58
        $region30: #{tpu_custom_call.1} parent=27 // pred_check_branch
          %184 = sbr.rel (%p182) target = $region32
        $region31: #{tpu_custom_call.1} parent=27 // pred_region
          %s185 = sand.u32 %s17, 1
          %s186 = scalar_lea.sflag [#allocation6], %s185
          %s187 = sand.u32 %s48, 1
          %s188 = smul.addr %s187, 16
          %s189 = scalar_lea.vmem [#allocation5], %s188
          %191 = vsyncadd %s186, 0
          %s192 = smul.addr %s17, 2
          %s193 = smul.addr %s192, 8
          %s194 = scalar_lea.hbm %s1, %s193
          %s195 = sshll.u32 %s194, 4
          %s196 = int_to_ptr.hbm [resolvable:$true] %s195
          %s197 = sshll.u32 %s189, 4
          %s198 = int_to_ptr.vmem [resolvable:$true] %s197
          %203 = dma.hbm_to_vmem [thread:$0]  %s196, 256, %s198, %s186, 128, 128, 8
        $region32: #{tpu_custom_call.1} parent=27 // pred_fallthru
          _
      $region28: #{tpu_custom_call.1} parent=5 // pred_fallthru
        _
      %p204 = scmp.le.s32.totalorder 1, %s17
      %p205 = scmp.lt.s32.totalorder %s17, 3
      %p206 = pnand %p204, %p205
      %p207 = pneg %p206
      // Predicated region
      $region33: #{tpu_custom_call.1} parent=5 // pred_check
        _
      $region34: #{tpu_custom_call.1} parent=5 // pred_check_branch
        %209 = sbr.rel (%p206) target = $region36
      $region35: #{tpu_custom_call.1} parent=5 // pred_region
        %s210 = ssub.s32 %s17, 1
        // Predicated region
        $region37: #{tpu_custom_call.1} parent=35 // pred_check
          %p211 = pneg %p38
        $region38: #{tpu_custom_call.1} parent=35 // pred_check_branch
          %213 = sbr.rel (%p211) target = $region40
        $region39: #{tpu_custom_call.1} parent=35 // pred_region
          %215 = dma.done [#allocation3], 512
        $region40: #{tpu_custom_call.1} parent=35 // pred_fallthru
          _
        %s216 = sand.u32 %s22, 1
        %s217 = scalar_lea.sflag [#allocation6], %s216
        %s218 = sand.u32 %s51, 1
        %s219 = smul.addr %s218, 16
        %s220 = scalar_lea.vmem [#allocation5], %s219
        // Predicated region
        $region41: #{tpu_custom_call.1} parent=35 // pred_check
          %p221 = pneg %p64
        $region42: #{tpu_custom_call.1} parent=35 // pred_check_branch
          %223 = sbr.rel (%p221) target = $region44
        $region43: #{tpu_custom_call.1} parent=35 // pred_region
          %225 = dma.done %s217, 256
        $region44: #{tpu_custom_call.1} parent=35 // pred_fallthru
          _
        // Predicated region
        $region45: #{tpu_custom_call.1} parent=35 // pred_check
          %p226 = pneg %p85
        $region46: #{tpu_custom_call.1} parent=35 // pred_check_branch
          %228 = sbr.rel (%p226) target = $region48
        $region47: #{tpu_custom_call.1} parent=35 // pred_region
          %230 = dma.done [#allocation6], 10240
        $region48: #{tpu_custom_call.1} parent=35 // pred_fallthru
          _
        %p231 = pneg %p38
        %p232 = pneg %p35
        %s233 = sand.u32 %s22, 1
        %s234 = scalar_lea.sflag [#allocation6], %s233
        %s235 = sand.u32 %s51, 1
        %s236 = smul.addr %s235, 16
        %s237 = scalar_lea.vmem [#allocation5], %s236
        %p238 = pneg %p64
        %p239 = pneg %p61
        %p240 = pneg %p85
        %p241 = pneg %p82
        %p242 = pneg %p106
        %p243 = pneg %p103
        %p244 = pneg %p132
        %p245 = pneg %p129
        %s246 = sand.u32 %s119, 1
        %s247 = scalar_lea.sflag [#allocation4], %s246
        %s248 = sand.u32 %s119, 1
        %s249 = smul.addr %s248, 16
        %s250 = scalar_lea.vmem [#allocation8], %s249
        %v251 = vld [vmem:[%s220] sm:$0xff]
        %v252 = vld [vmem:[%s220 + $0x8] sm:$0xff]
        %v253 = vld [vmem:[#allocation2] sm:$0xff]
        %v254 = vld [vmem:[#allocation2 + $0x8] sm:$0xff]
        %vm255 = vcmask 130048
        %v257 = vsel %vm255, %v253, 0
        %v260 = vsel %vm255, %v254, 0
        %262 = vmatpush.msra.mxu0 0.0
        %263 = vmatpush.msra.mxu0 0.0
        %264 = vmatpush.msra.mxu0 0.0
        %265 = vmatpush.msra.mxu0 0.0
        %266 = vmatpush.msra.mxu0 0.0
        %267 = vmatpush.msra.mxu0 0.0
        %268 = vmatpush.msra.mxu0 0.0
        %269 = vmatpush.msra.mxu0 0.0
        %270 = vmatpush.msra.mxu0 0.0
        %271 = vmatpush.msra.mxu0 0.0
        %272 = vmatpush.msra.mxu0 0.0
        %273 = vmatpush.msra.mxu0 0.0
        %274 = vmatpush.msra.mxu0 0.0
        %275 = vmatpush.msra.mxu0 0.0
        %276 = vmatpush.msra.mxu0 %v252
        %277 = vmatpush.msra.mxu0 %v251
        %278 = vmatmul.f32.gmra.mxu0 %v257
        %v279 = vpop.f32.mrf.mxu0
        %v280 = vadd.f32 0.0, %v279
        %281 = vmatmul.f32.gmra.mxu0 %v260
        %v282 = vpop.f32.mrf.mxu0
        %v283 = vadd.f32 0.0, %v282
        %284 = vdwg.mxu0
        %285 = vmatpush.msra.mxu0 0.0
        %286 = vmatpush.msra.mxu0 0.0
        %287 = vmatpush.msra.mxu0 0.0
        %288 = vmatpush.msra.mxu0 0.0
        %289 = vmatpush.msra.mxu0 0.0
        %290 = vmatpush.msra.mxu0 0.0
        %291 = vmatpush.msra.mxu0 0.0
        %292 = vmatpush.msra.mxu0 0.0
        %293 = vmatpush.msra.mxu0 0.0
        %294 = vmatpush.msra.mxu0 0.0
        %295 = vmatpush.msra.mxu0 0.0
        %296 = vmatpush.msra.mxu0 0.0
        %297 = vmatpush.msra.mxu0 0.0
        %298 = vmatpush.msra.mxu0 0.0
        %299 = vmatpush.msra.mxu0 %v283
        %300 = vmatpush.msra.mxu0 %v280
        %301 = vmatmul.f32.gmra.mxu0 %v257
        %v302 = vpop.f32.mrf.mxu0
        %v303 = vadd.f32 0.0, %v302
        %304 = vmatmul.f32.gmra.mxu0 %v260
        %v305 = vpop.f32.mrf.mxu0
        %v306 = vadd.f32 0.0, %v305
        %307 = vdwg.mxu0
        %v308 = vmul.f32 %v303, 2.0
        %v309 = vmul.f32 %v306, 2.0
        %v310 = vsub.f32 %v308, %v251
        %v311 = vsub.f32 %v309, %v252
        %s312 = scalar_lea.vmem [#allocation2], 16
        %v313 = vld [vmem:[%s312] sm:$0xff]
        %v314 = vld [vmem:[%s312 + $0x8] sm:$0xff]
        %v316 = vsel %vm255, %v313, 0
        %v319 = vsel %vm255, %v314, 0
        %321 = vmatpush.msra.mxu0 0.0
        %322 = vmatpush.msra.mxu0 0.0
        %323 = vmatpush.msra.mxu0 0.0
        %324 = vmatpush.msra.mxu0 0.0
        %325 = vmatpush.msra.mxu0 0.0
        %326 = vmatpush.msra.mxu0 0.0
        %327 = vmatpush.msra.mxu0 0.0
        %328 = vmatpush.msra.mxu0 0.0
        %329 = vmatpush.msra.mxu0 0.0
        %330 = vmatpush.msra.mxu0 0.0
        %331 = vmatpush.msra.mxu0 0.0
        %332 = vmatpush.msra.mxu0 0.0
        %333 = vmatpush.msra.mxu0 0.0
        %334 = vmatpush.msra.mxu0 0.0
        %335 = vmatpush.msra.mxu0 %v283
        %336 = vmatpush.msra.mxu0 %v280
        %337 = vmatmul.f32.gmra.mxu0 %v316
        %v338 = vpop.f32.mrf.mxu0
        %v339 = vadd.f32 0.0, %v338
        %340 = vmatmul.f32.gmra.mxu0 %v319
        %v341 = vpop.f32.mrf.mxu0
        %v342 = vadd.f32 0.0, %v341
        %343 = vdwg.mxu0
        %344 = vmatpush.msra.mxu0 0.0
        %345 = vmatpush.msra.mxu0 0.0
        %346 = vmatpush.msra.mxu0 0.0
        %347 = vmatpush.msra.mxu0 0.0
        %348 = vmatpush.msra.mxu0 0.0
        %349 = vmatpush.msra.mxu0 0.0
        %350 = vmatpush.msra.mxu0 0.0
        %351 = vmatpush.msra.mxu0 0.0
        %352 = vmatpush.msra.mxu0 0.0
        %353 = vmatpush.msra.mxu0 0.0
        %354 = vmatpush.msra.mxu0 0.0
        %355 = vmatpush.msra.mxu0 0.0
        %356 = vmatpush.msra.mxu0 0.0
        %357 = vmatpush.msra.mxu0 0.0
        %358 = vmatpush.msra.mxu0 %v342
        %359 = vmatpush.msra.mxu0 %v339
        %360 = vmatmul.f32.gmra.mxu0 %v316
        %v361 = vpop.f32.mrf.mxu0
        %v362 = vadd.f32 0.0, %v361
        %363 = vmatmul.f32.gmra.mxu0 %v319
        %v364 = vpop.f32.mrf.mxu0
        %v365 = vadd.f32 0.0, %v364
        %366 = vdwg.mxu0
        %v367 = vmul.f32 %v362, 2.0
        %v368 = vmul.f32 %v365, 2.0
        %v369 = vsub.f32 %v367, %v280
        %v370 = vsub.f32 %v368, %v283
        %v371 = vld [vmem:[#allocation7] sm:$0xff]
        %v372 = vld [vmem:[#allocation7 + $0x8] sm:$0xff]
        %v373 = vld [vmem:[#allocation7 + $0x10] sm:$0xff]
        %v374 = vld [vmem:[#allocation7 + $0x18] sm:$0xff]
        %v375 = vld [vmem:[#allocation7 + $0x20] sm:$0xff]
        %v376 = vld [vmem:[#allocation7 + $0x28] sm:$0xff]
        %v377 = vld [vmem:[#allocation7 + $0x30] sm:$0xff]
        %v378 = vld [vmem:[#allocation7 + $0x38] sm:$0xff]
        %v379 = vld [vmem:[#allocation7 + $0x40] sm:$0xff]
        %v380 = vld [vmem:[#allocation7 + $0x48] sm:$0xff]
        %v381 = vld [vmem:[#allocation7 + $0x50] sm:$0xff]
        %v382 = vld [vmem:[#allocation7 + $0x58] sm:$0xff]
        %v383 = vld [vmem:[#allocation7 + $0x60] sm:$0xff]
        %v384 = vld [vmem:[#allocation7 + $0x68] sm:$0xff]
        %v385 = vld [vmem:[#allocation7 + $0x70] sm:$0xff]
        %v386 = vld [vmem:[#allocation7 + $0x78] sm:$0xff]
        %v387 = vld [vmem:[#allocation7 + $0x80] sm:$0xff]
        %v388 = vld [vmem:[#allocation7 + $0x88] sm:$0xff]
        %v389 = vld [vmem:[#allocation7 + $0x90] sm:$0xff]
        %v390 = vld [vmem:[#allocation7 + $0x98] sm:$0xff]
        %v391 = vld [vmem:[#allocation7 + $0xa0] sm:$0xff]
        %v392 = vld [vmem:[#allocation7 + $0xa8] sm:$0xff]
        %v393 = vld [vmem:[#allocation7 + $0xb0] sm:$0xff]
        %v394 = vld [vmem:[#allocation7 + $0xb8] sm:$0xff]
        %v395 = vld [vmem:[#allocation7 + $0xc0] sm:$0xff]
        %v396 = vld [vmem:[#allocation7 + $0xc8] sm:$0xff]
        %v397 = vld [vmem:[#allocation7 + $0xd0] sm:$0xff]
        %v398 = vld [vmem:[#allocation7 + $0xd8] sm:$0xff]
        %v399 = vld [vmem:[#allocation7 + $0xe0] sm:$0xff]
        %v400 = vld [vmem:[#allocation7 + $0xe8] sm:$0xff]
        %v401 = vld [vmem:[#allocation7 + $0xf0] sm:$0xff]
        %v402 = vld [vmem:[#allocation7 + $0xf8] sm:$0xff]
        %v403 = vld [vmem:[#allocation7 + $0x100] sm:$0xff]
        %v404 = vld [vmem:[#allocation7 + $0x108] sm:$0xff]
        %v405 = vld [vmem:[#allocation7 + $0x110] sm:$0xff]
        %v406 = vld [vmem:[#allocation7 + $0x118] sm:$0xff]
        %v407 = vld [vmem:[#allocation7 + $0x120] sm:$0xff]
        %v408 = vld [vmem:[#allocation7 + $0x128] sm:$0xff]
        %v409 = vld [vmem:[#allocation7 + $0x130] sm:$0xff]
        %v410 = vld [vmem:[#allocation7 + $0x138] sm:$0xff]
        %v411 = vld [vmem:[#allocation7 + $0x140] sm:$0xff]
        %v412 = vld [vmem:[#allocation7 + $0x148] sm:$0xff]
        %v413 = vld [vmem:[#allocation7 + $0x150] sm:$0xff]
        %v414 = vld [vmem:[#allocation7 + $0x158] sm:$0xff]
        %v415 = vld [vmem:[#allocation7 + $0x160] sm:$0xff]
        %v416 = vld [vmem:[#allocation7 + $0x168] sm:$0xff]
        %v417 = vld [vmem:[#allocation7 + $0x170] sm:$0xff]
        %v418 = vld [vmem:[#allocation7 + $0x178] sm:$0xff]
        %v419 = vld [vmem:[#allocation7 + $0x180] sm:$0xff]
        %v420 = vld [vmem:[#allocation7 + $0x188] sm:$0xff]
        %v421 = vld [vmem:[#allocation7 + $0x190] sm:$0xff]
        %v422 = vld [vmem:[#allocation7 + $0x198] sm:$0xff]
        %v423 = vld [vmem:[#allocation7 + $0x1a0] sm:$0xff]
        %v424 = vld [vmem:[#allocation7 + $0x1a8] sm:$0xff]
        %v425 = vld [vmem:[#allocation7 + $0x1b0] sm:$0xff]
        %v426 = vld [vmem:[#allocation7 + $0x1b8] sm:$0xff]
        %v427 = vld [vmem:[#allocation7 + $0x1c0] sm:$0xff]
        %v428 = vld [vmem:[#allocation7 + $0x1c8] sm:$0xff]
        %v429 = vld [vmem:[#allocation7 + $0x1d0] sm:$0xff]
        %v430 = vld [vmem:[#allocation7 + $0x1d8] sm:$0xff]
        %v431 = vld [vmem:[#allocation7 + $0x1e0] sm:$0xff]
        %v432 = vld [vmem:[#allocation7 + $0x1e8] sm:$0xff]
        %v433 = vld [vmem:[#allocation7 + $0x1f0] sm:$0xff]
        %v434 = vld [vmem:[#allocation7 + $0x1f8] sm:$0xff]
        %v435 = vld [vmem:[#allocation7 + $0x200] sm:$0xff]
        %v436 = vld [vmem:[#allocation7 + $0x208] sm:$0xff]
        %v437 = vld [vmem:[#allocation7 + $0x210] sm:$0xff]
        %v438 = vld [vmem:[#allocation7 + $0x218] sm:$0xff]
        %v439 = vld [vmem:[#allocation7 + $0x220] sm:$0xff]
        %v440 = vld [vmem:[#allocation7 + $0x228] sm:$0xff]
        %v441 = vld [vmem:[#allocation7 + $0x230] sm:$0xff]
        %v442 = vld [vmem:[#allocation7 + $0x238] sm:$0xff]
        %v443 = vld [vmem:[#allocation7 + $0x240] sm:$0xff]
        %v444 = vld [vmem:[#allocation7 + $0x248] sm:$0xff]
        %v445 = vld [vmem:[#allocation7 + $0x250] sm:$0xff]
        %v446 = vld [vmem:[#allocation7 + $0x258] sm:$0xff]
        %v447 = vld [vmem:[#allocation7 + $0x260] sm:$0xff]
        %v448 = vld [vmem:[#allocation7 + $0x268] sm:$0xff]
        %v449 = vld [vmem:[#allocation7 + $0x270] sm:$0xff]
        %v450 = vld [vmem:[#allocation7 + $0x278] sm:$0xff]
        %v451 = vld [vmem:[%s3] sm:$0x1]
        %v453 = vperm.slane %v451, 0
        %455 = vmatpush.msra.mxu0 %v386
        %456 = vmatpush.msra.mxu0 %v385
        %457 = vmatpush.msra.mxu0 %v384
        %458 = vmatpush.msra.mxu0 %v383
        %459 = vmatpush.msra.mxu0 %v382
        %460 = vmatpush.msra.mxu0 %v381
        %461 = vmatpush.msra.mxu0 %v380
        %462 = vmatpush.msra.mxu0 %v379
        %463 = vmatpush.msra.mxu0 %v378
        %464 = vmatpush.msra.mxu0 %v377
        %465 = vmatpush.msra.mxu0 %v376
        %466 = vmatpush.msra.mxu0 %v375
        %467 = vmatpush.msra.mxu0 %v374
        %468 = vmatpush.msra.mxu0 %v373
        %469 = vmatpush.msra.mxu0 %v372
        %470 = vmatpush.msra.mxu0 %v371
        %471 = vmatmul.f32.gmra.mxu0 %v251
        %v472 = vpop.f32.mrf.mxu0
        %v473 = vadd.f32 %v453, %v472
        %474 = vmatmul.f32.gmra.mxu0 %v252
        %v475 = vpop.f32.mrf.mxu0
        %v476 = vadd.f32 %v453, %v475
        %477 = vdwg.mxu0
        %478 = vmatpush.msra.mxu0 %v402
        %479 = vmatpush.msra.mxu0 %v401
        %480 = vmatpush.msra.mxu0 %v400
        %481 = vmatpush.msra.mxu0 %v399
        %482 = vmatpush.msra.mxu0 %v398
        %483 = vmatpush.msra.mxu0 %v397
        %484 = vmatpush.msra.mxu0 %v396
        %485 = vmatpush.msra.mxu0 %v395
        %486 = vmatpush.msra.mxu0 %v394
        %487 = vmatpush.msra.mxu0 %v393
        %488 = vmatpush.msra.mxu0 %v392
        %489 = vmatpush.msra.mxu0 %v391
        %490 = vmatpush.msra.mxu0 %v390
        %491 = vmatpush.msra.mxu0 %v389
        %492 = vmatpush.msra.mxu0 %v388
        %493 = vmatpush.msra.mxu0 %v387
        %494 = vmatmul.f32.gmra.mxu0 %v280
        %v495 = vpop.f32.mrf.mxu0
        %v496 = vadd.f32 %v473, %v495
        %497 = vmatmul.f32.gmra.mxu0 %v283
        %v498 = vpop.f32.mrf.mxu0
        %v499 = vadd.f32 %v476, %v498
        %500 = vdwg.mxu0
        %501 = vmatpush.msra.mxu0 %v418
        %502 = vmatpush.msra.mxu0 %v417
        %503 = vmatpush.msra.mxu0 %v416
        %504 = vmatpush.msra.mxu0 %v415
        %505 = vmatpush.msra.mxu0 %v414
        %506 = vmatpush.msra.mxu0 %v413
        %507 = vmatpush.msra.mxu0 %v412
        %508 = vmatpush.msra.mxu0 %v411
        %509 = vmatpush.msra.mxu0 %v410
        %510 = vmatpush.msra.mxu0 %v409
        %511 = vmatpush.msra.mxu0 %v408
        %512 = vmatpush.msra.mxu0 %v407
        %513 = vmatpush.msra.mxu0 %v406
        %514 = vmatpush.msra.mxu0 %v405
        %515 = vmatpush.msra.mxu0 %v404
        %516 = vmatpush.msra.mxu0 %v403
        %517 = vmatmul.f32.gmra.mxu0 %v310
        %v518 = vpop.f32.mrf.mxu0
        %v519 = vadd.f32 %v496, %v518
        %520 = vmatmul.f32.gmra.mxu0 %v311
        %v521 = vpop.f32.mrf.mxu0
        %v522 = vadd.f32 %v499, %v521
        %523 = vdwg.mxu0
        %524 = vmatpush.msra.mxu0 %v434
        %525 = vmatpush.msra.mxu0 %v433
        %526 = vmatpush.msra.mxu0 %v432
        %527 = vmatpush.msra.mxu0 %v431
        %528 = vmatpush.msra.mxu0 %v430
        %529 = vmatpush.msra.mxu0 %v429
        %530 = vmatpush.msra.mxu0 %v428
        %531 = vmatpush.msra.mxu0 %v427
        %532 = vmatpush.msra.mxu0 %v426
        %533 = vmatpush.msra.mxu0 %v425
        %534 = vmatpush.msra.mxu0 %v424
        %535 = vmatpush.msra.mxu0 %v423
        %536 = vmatpush.msra.mxu0 %v422
        %537 = vmatpush.msra.mxu0 %v421
        %538 = vmatpush.msra.mxu0 %v420
        %539 = vmatpush.msra.mxu0 %v419
        %540 = vmatmul.f32.gmra.mxu0 %v339
        %v541 = vpop.f32.mrf.mxu0
        %v542 = vadd.f32 %v519, %v541
        %543 = vmatmul.f32.gmra.mxu0 %v342
        %v544 = vpop.f32.mrf.mxu0
        %v545 = vadd.f32 %v522, %v544
        %546 = vdwg.mxu0
        %547 = vmatpush.msra.mxu0 %v450
        %548 = vmatpush.msra.mxu0 %v449
        %549 = vmatpush.msra.mxu0 %v448
        %550 = vmatpush.msra.mxu0 %v447
        %551 = vmatpush.msra.mxu0 %v446
        %552 = vmatpush.msra.mxu0 %v445
        %553 = vmatpush.msra.mxu0 %v444
        %554 = vmatpush.msra.mxu0 %v443
        %555 = vmatpush.msra.mxu0 %v442
        %556 = vmatpush.msra.mxu0 %v441
        %557 = vmatpush.msra.mxu0 %v440
        %558 = vmatpush.msra.mxu0 %v439
        %559 = vmatpush.msra.mxu0 %v438
        %560 = vmatpush.msra.mxu0 %v437
        %561 = vmatpush.msra.mxu0 %v436
        %562 = vmatpush.msra.mxu0 %v435
        %563 = vmatmul.f32.gmra.mxu0 %v369
        %v564 = vpop.f32.mrf.mxu0
        %v565 = vadd.f32 %v542, %v564
        %566 = vmatmul.f32.gmra.mxu0 %v370
        %v567 = vpop.f32.mrf.mxu0
        %v568 = vadd.f32 %v545, %v567
        %569 = vdwg.mxu0
        %570 = vst [vmem:[%s250] sm:$0xff] %v565
        %571 = vst [vmem:[%s250 + $0x8] sm:$0xff] %v568
        %s572 = sand.u32 %s119, 1
        %s573 = scalar_lea.sflag [#allocation4], %s572
        %s574 = sand.u32 %s119, 1
        %s575 = smul.addr %s574, 16
        %s576 = scalar_lea.vmem [#allocation8], %s575
        // Predicated region
        $region49: #{tpu_custom_call.1} parent=35 // pred_check
          %p577 = pneg %p129
        $region50: #{tpu_custom_call.1} parent=35 // pred_check_branch
          %579 = sbr.rel (%p577) target = $region52
        $region51: #{tpu_custom_call.1} parent=35 // pred_region
          %581 = vsyncadd %s573, 0
          %s582 = smul.addr %s22, 2
          %s583 = smul.addr %s582, 8
          %s584 = scalar_lea.hbm %s4, %s583
          %s585 = sshll.u32 %s576, 4
          %s586 = int_to_ptr.vmem [resolvable:$true] %s585
          %s587 = sshll.u32 %s584, 4
          %s588 = int_to_ptr.hbm [resolvable:$true] %s587
          %593 = dma.vmem_to_hbm [thread:$0]  %s586, 256, %s588, %s573, 128, 128, 8
        $region52: #{tpu_custom_call.1} parent=35 // pred_fallthru
          _
      $region36: #{tpu_custom_call.1} parent=5 // pred_fallthru
        _
      %p594 = scmp.le.s32.totalorder 2, %s17
      // Predicated region
      $region53: #{tpu_custom_call.1} parent=5 // pred_check
        %p595 = pneg %p594
      $region54: #{tpu_custom_call.1} parent=5 // pred_check_branch
        %597 = sbr.rel (%p595) target = $region56
      $region55: #{tpu_custom_call.1} parent=5 // pred_region
        %s598 = ssub.s32 %s17, 2
        // Predicated region
        $region57: #{tpu_custom_call.1} parent=55 // pred_check
          %p599 = pneg %p135
        $region58: #{tpu_custom_call.1} parent=55 // pred_check_branch
          %601 = sbr.rel (%p599) target = $region60
        $region59: #{tpu_custom_call.1} parent=55 // pred_region
          %s602 = sand.u32 %s120, 1
          %s603 = scalar_lea.sflag [#allocation4], %s602
          %s604 = sand.u32 %s120, 1
          %s605 = smul.addr %s604, 16
          %s606 = scalar_lea.vmem [#allocation8], %s605
          %608 = dma.done %s603, 256
        $region60: #{tpu_custom_call.1} parent=55 // pred_fallthru
          _
      $region56: #{tpu_custom_call.1} parent=5 // pred_fallthru
        _
    $region6: #{tpu_custom_call.1} parent=1 // loop_footer
      %s21 = sadd.s32 1, %s17
    $region7: #{tpu_custom_call.1} parent=1 // loop_footer_branch
      %16 = sbr.rel target = $region3
    $region8: #{tpu_custom_call.1} parent=1 // loop_exit
      _
    %609 = vsyncpa [#allocation3], 1
    %s610 = scalar_lea.sflag [#allocation3], 1
    %611 = vsyncpa %s610, 1
    %612 = vsyncpa [#allocation6], 1
    %s613 = scalar_lea.sflag [#allocation6], 1
    %614 = vsyncpa %s613, 1
    %615 = vsyncpa [#allocation4], 1
    %s616 = scalar_lea.sflag [#allocation4], 1
    %617 = vsyncpa %s616, 1

</llo_original>
